<compile_context>
chip_gen: v5e
topology: v5e:2x2
jax: 0.10.0
libtpu: 0.0.40
codegen_flags: <defaults>
</compile_context>

<pallas_src>
import jax
import jax.numpy as jnp
import numpy as np
from jax.experimental import pallas as pl
from jax.experimental.pallas import tpu as pltpu


def _round_up(x, m):
    return (x + m - 1) // m * m


def _make_kernel(mxu_dtype):
    def kernel(yh_ref, y_ref, csw_ref, csh_ref, out_ref):
        TB, H, W = yh_ref.shape
        Whp = csw_ref.shape[1] // 2          # per-half lane-padded rfft width (x128)

        # Difference for this slab of images; fed to the MXU in bf16.
        d = yh_ref[...].astype(jnp.float32) - y_ref[...].astype(jnp.float32)
        d2 = d.reshape(TB * H, W).astype(mxu_dtype)

        # ---- Stage 1: rfft along W; the (b, h) batch is folded into M. ----
        # csw = [Cw | -Sw], each half zero-padded to Whp -> X = [xr | xi] with
        # exactly-zero padded lanes.
        X = jnp.dot(d2, csw_ref[...], preferred_element_type=jnp.float32)
        X3 = X.reshape(TB, H, 2 * Whp).astype(mxu_dtype)

        # ---- Stage 2: full DFT along H, one fused batched matmul. ----
        # csh = [Ch; Sh] is DMA'd once as (2H, H); the broadcast over the batch
        # lives only in VMEM (bf16) and keeps the contraction a plain batched
        # matmul (same pattern as flash attention's 'bqk,bkd->bqd').
        # TODO(synk): for very large H*W on v7x, chunk this stage over H tiles
        # so only a slice of X3/A is live at once.
        csh_b = jnp.broadcast_to(csh_ref[...], (TB, 2 * H, H))
        A = jnp.einsum('bgh,bhw->bgw', csh_b, X3,
                       preferred_element_type=jnp.float32)       # (TB, 2H, 2*Whp)

        # re F = Ch.xr + Sh.xi ; im F = Ch.xi - Sh.xr
        # Lane offsets 0 / Whp are multiples of 128; sublane offset H is a
        # multiple of 8 -> all slices are layout-aligned (no relayouts).
        re = A[:, :H, :Whp] + A[:, H:, Whp:]
        im = A[:, :H, Whp:] - A[:, H:, :Whp]
        mag = jnp.sqrt(re * re + im * im)                         # (TB, H, Whp)

        # Lane-dense partial sum: reduce only across major dims (cheap VPU adds)
        # and store one (8, Whp) slab per grid step.
        partial = jnp.sum(mag.reshape((TB * H) // 8, 8, Whp), axis=0)
        out_ref[0] = partial

    return kernel


def _dft_matrices(H, W, Whp, dtype):
    """csw = [Cw | -Sw] (W, 2*Whp), csh = [Ch ; Sh] (2H, H)."""
    Wh = W // 2 + 1
    n = np.arange(W, dtype=np.float64)[:, None]
    l = np.arange(Wh, dtype=np.float64)[None, :]
    ang_w = 2.0 * np.pi * n * l / W
    csw = np.zeros((W, 2 * Whp), dtype=np.float64)
    csw[:, :Wh] = np.cos(ang_w)
    csw[:, Whp:Whp + Wh] = -np.sin(ang_w)

    m = np.arange(H, dtype=np.float64)[:, None]
    k = np.arange(H, dtype=np.float64)[None, :]
    ang_h = 2.0 * np.pi * m * k / H
    csh = np.concatenate([np.cos(ang_h), np.sin(ang_h)], axis=0)   # (2H, H)
    return jnp.asarray(csw, dtype), jnp.asarray(csh, dtype)


def _vmem_tb_cap(H, W, Whp, in_bytes, budget_bytes):
    """Conservative per-image VMEM bytes for one grid step (everything counted live)."""
    per_img = (
        2 * 2 * H * W * in_bytes        # two input blocks, double-buffered
        + H * W * (4 + 2)               # f32 difference + bf16 copy fed to the MXU
        + H * 2 * Whp * (4 + 2)         # X (f32) + X3 cast to bf16
        + 2 * H * 2 * Whp * 4           # A (f32)
        + 3 * H * Whp * 4               # re, im, |.|
        + 2 * 2 * H * H                 # per-batch csh broadcast (bf16)
    )
    fixed = 2 * 2 * (W * 2 * Whp + 2 * H * H) + 2 * 8 * Whp * 4    # DFT mats + out block
    return max(1, (budget_bytes - fixed) // per_img)


def _choose_tb(N, tb_cap):
    """Largest divisor of N <= tb_cap that still leaves >= 2 grid steps (v7x megacore)."""
    tb_cap = max(1, min(int(tb_cap), 128, N))
    if N <= 1:
        return 1
    upper = min(tb_cap, N // 2)
    for d in range(upper, 0, -1):
        if N % d == 0:
            return d
    return 1


def four_domain_loss2(y_hat, y, *, mxu_dtype=jnp.bfloat16):
    """y_hat, y: (B, C, H, W) real arrays. Returns scalar float32 loss."""
    assert y_hat.shape == y.shape and y_hat.ndim == 4, "expected (B, C, H, W)"
    B, C, H, W = y_hat.shape
    N = B * C
    Wh = W // 2 + 1

    if N == 0:
        return jnp.float32(0.0)
    if H % 8 != 0:
        # TODO(synk): pad H to a multiple of 8 inside the kernel (masked tail)
        # instead of falling back to the XLA FFT for awkward heights.
        d = y_hat.astype(jnp.float32) - y.astype(jnp.float32)
        return jnp.mean(jnp.abs(jnp.fft.rfft2(d)))

    # TODO(synk): for W < ~254 the per-half lane padding (Wh -> 128) wastes
    # lanes; packing both halves into one 128-lane block would trim stage-1/2 N.
    Whp = _round_up(Wh, 128)

    # ---- per-step VMEM budget -> images per grid step (TB) ------------------
    try:
        vmem_cap = int(pltpu.get_tpu_info().vmem_capacity_bytes)
    except Exception:                       # interpret mode / older runtimes
        vmem_cap = 64 << 20
    vmem_limit = int(min(vmem_cap * 3 // 4, 100 << 20))
    in_bytes = jnp.dtype(y_hat.dtype).itemsize
    tb_cap = _vmem_tb_cap(H, W, Whp, in_bytes, (vmem_limit * 7) // 10)
    TB = _choose_tb(N, tb_cap)
    G = N // TB                             # TB divides N -> no HBM padding pass

    # Native-dtype inputs; merging the leading (B, C) dims is a free reshape.
    yh3 = y_hat.reshape(N, H, W)
    yy3 = y.reshape(N, H, W)
    csw, csh = _dft_matrices(H, W, Whp, mxu_dtype)

    flops = 2 * N * H * W * (2 * Whp) + 2 * N * (2 * H) * H * (2 * Whp)
    cost = pl.CostEstimate(
        flops=int(flops),
        transcendentals=int(N * H * Whp),
        bytes_accessed=int(2 * N * H * W * in_bytes
                           + csw.size * 2 + csh.size * 2 + G * 8 * Whp * 4),
    )

    partials = pl.pallas_call(
        _make_kernel(mxu_dtype),
        out_shape=jax.ShapeDtypeStruct((G, 8, Whp), jnp.float32),
        grid_spec=pltpu.PrefetchScalarGridSpec(
            num_scalar_prefetch=0,
            grid=(G,),
            in_specs=[
                pl.BlockSpec((TB, H, W), lambda i: (i, 0, 0)),       # y_hat slab
                pl.BlockSpec((TB, H, W), lambda i: (i, 0, 0)),       # y slab
                pl.BlockSpec((W, 2 * Whp), lambda i: (0, 0)),        # [Cw | -Sw]
                pl.BlockSpec((2 * H, H), lambda i: (0, 0)),          # [Ch ; Sh]
            ],
            out_specs=pl.BlockSpec((1, 8, Whp), lambda i: (i, 0, 0)),
        ),
        compiler_params=pltpu.CompilerParams(
            dimension_semantics=("parallel",),
            vmem_limit_bytes=vmem_limit,
        ),
        cost_estimate=cost,
    )(yh3, yy3, csw, csh)

    # F.l1_loss default reduction='mean' over all complex rfft2 output elements.
    # Padded lanes contribute exactly zero to the partial sums.
    return jnp.sum(partials) / jnp.float32(N * H * Wh)


if __name__ == "__main__":
    key = jax.random.PRNGKey(0)
    k1, k2 = jax.random.split(key)
    B, C, H, W = 2, 4, 16, 16
    y_hat = jax.random.normal(k1, (B, C, H, W), dtype=jnp.float32)
    y = jax.random.normal(k2, (B, C, H, W), dtype=jnp.float32)

    loss = jax.block_until_ready(four_domain_loss2(y_hat, y))

    # Reference: same semantics as torch.fft.rfft2 + complex L1 mean.
    ref = jnp.mean(jnp.abs(jnp.fft.rfft2(y_hat) - jnp.fft.rfft2(y)))
    assert np.allclose(np.asarray(loss), np.asarray(ref), rtol=2e-2, atol=2e-2), (
        float(loss), float(ref))

    print("KERNEL_OK")
</pallas_src>

<mosaic_0001>
module attributes {stable_mosaic.version = 11 : i64} {
  func.func @kernel(%arg0: i32, %arg1: memref<4x16x16xf32, #tpu.memory_space<vmem>>, %arg2: memref<4x16x16xf32, #tpu.memory_space<vmem>>, %arg3: memref<16x256xbf16, #tpu.memory_space<vmem>>, %arg4: memref<32x16xbf16, #tpu.memory_space<vmem>>, %arg5: memref<1x8x128xf32, #tpu.memory_space<vmem>>) attributes {dimension_semantics = [#tpu.dimension_semantics<parallel>], iteration_bounds = array<i64: 2>, scalar_prefetch = 0 : i64, scratch_operands = 0 : i64, tpu.core_type = #tpu.core_type<tc>, window_params = [{transform_indices = @transform_0, window_bounds = array<i64: 4, 16, 16>}, {transform_indices = @transform_1, window_bounds = array<i64: 4, 16, 16>}, {pipeline_mode = #tpu.pipeline_mode<synchronous>, transform_indices = @transform_2, window_bounds = array<i64: 16, 256>}, {pipeline_mode = #tpu.pipeline_mode<synchronous>, transform_indices = @transform_3, window_bounds = array<i64: 32, 16>}, {transform_indices = @transform_4, window_bounds = array<i64: 1, 8, 128>}]} {
    %c0 = arith.constant 0 : index
    %c0_0 = arith.constant 0 : index
    %c0_1 = arith.constant 0 : index
    %0 = vector.load %arg1[%c0, %c0_0, %c0_1] : memref<4x16x16xf32, #tpu.memory_space<vmem>>, vector<4x16x16xf32>
    %c0_2 = arith.constant 0 : index
    %c0_3 = arith.constant 0 : index
    %c0_4 = arith.constant 0 : index
    %1 = vector.load %arg2[%c0_2, %c0_3, %c0_4] : memref<4x16x16xf32, #tpu.memory_space<vmem>>, vector<4x16x16xf32>
    %2 = arith.subf %0, %1 : vector<4x16x16xf32>
    %3 = vector.shape_cast %2 : vector<4x16x16xf32> to vector<64x16xf32>
    %4 = arith.truncf %3 : vector<64x16xf32> to vector<64x16xbf16>
    %c0_5 = arith.constant 0 : index
    %c0_6 = arith.constant 0 : index
    %5 = vector.load %arg3[%c0_5, %c0_6] : memref<16x256xbf16, #tpu.memory_space<vmem>>, vector<16x256xbf16>
    %cst = arith.constant dense<0.000000e+00> : vector<64x256xf32>
    %6 = tpu.matmul %4, %5, %cst {dimension_numbers = #tpu.dot_dimension_numbers<[1], [0], [0], [1], [0, 0, 1, 1], [], []>} : vector<64x16xbf16>, vector<16x256xbf16>, vector<64x256xf32> -> vector<64x256xf32>
    %7 = vector.shape_cast %6 : vector<64x256xf32> to vector<4x16x256xf32>
    %8 = arith.truncf %7 : vector<4x16x256xf32> to vector<4x16x256xbf16>
    %c0_7 = arith.constant 0 : index
    %c0_8 = arith.constant 0 : index
    %9 = vector.load %arg4[%c0_7, %c0_8] : memref<32x16xbf16, #tpu.memory_space<vmem>>, vector<32x16xbf16>
    %10 = vector.shape_cast %9 : vector<32x16xbf16> to vector<1x32x16xbf16>
    %11 = vector.broadcast %10 : vector<1x32x16xbf16> to vector<4x32x16xbf16>
    "tpu.trace_start"() <{level = 10 : i32, message = "bgh,bhw->bgw"}> : () -> ()
    %cst_9 = arith.constant dense<0.000000e+00> : vector<4x32x256xf32>
    %12 = tpu.matmul %11, %8, %cst_9 {dimension_numbers = #tpu.dot_dimension_numbers<[2], [1], [1], [2], [0, 0, 0, 1, 1, 2], [0], [0]>} : vector<4x32x16xbf16>, vector<4x16x256xbf16>, vector<4x32x256xf32> -> vector<4x32x256xf32>
    "tpu.trace_stop"() : () -> ()
    %13 = vector.extract_strided_slice %12 {offsets = [0, 0, 0], sizes = [4, 16, 128], strides = [1, 1, 1]} : vector<4x32x256xf32> to vector<4x16x128xf32>
    %14 = vector.extract_strided_slice %12 {offsets = [0, 16, 128], sizes = [4, 16, 128], strides = [1, 1, 1]} : vector<4x32x256xf32> to vector<4x16x128xf32>
    %15 = arith.addf %13, %14 : vector<4x16x128xf32>
    %16 = vector.extract_strided_slice %12 {offsets = [0, 0, 128], sizes = [4, 16, 128], strides = [1, 1, 1]} : vector<4x32x256xf32> to vector<4x16x128xf32>
    %17 = vector.extract_strided_slice %12 {offsets = [0, 16, 0], sizes = [4, 16, 128], strides = [1, 1, 1]} : vector<4x32x256xf32> to vector<4x16x128xf32>
    %18 = arith.subf %16, %17 : vector<4x16x128xf32>
    %19 = arith.mulf %15, %15 : vector<4x16x128xf32>
    %20 = arith.mulf %18, %18 : vector<4x16x128xf32>
    %21 = arith.addf %19, %20 : vector<4x16x128xf32>
    %22 = math.sqrt %21 : vector<4x16x128xf32>
    %23 = vector.shape_cast %22 : vector<4x16x128xf32> to vector<8x8x128xf32>
    %cst_10 = arith.constant dense<0.000000e+00> : vector<8x128xf32>
    %24 = vector.multi_reduction <add>, %23, %cst_10 [0] : vector<8x8x128xf32> to vector<8x128xf32>
    %c0_11 = arith.constant 0 : index
    %c0_12 = arith.constant 0 : index
    %c0_13 = arith.constant 0 : index
    %25 = vector.load %arg5[%c0_11, %c0_12, %c0_13] : memref<1x8x128xf32, #tpu.memory_space<vmem>>, vector<1x8x128xf32>
    %26 = vector.shape_cast %25 : vector<1x8x128xf32> to vector<8x128xf32>
    %27 = vector.shape_cast %24 : vector<8x128xf32> to vector<1x8x128xf32>
    tpu.vector_store %arg5[%c0_11, %c0_12, %c0_13], %27 {strides = array<i32>} : memref<1x8x128xf32, #tpu.memory_space<vmem>>, vector<1x8x128xf32>,
    return
  }
  func.func @transform_0(%arg0: i32) -> (i32, i32, i32) {
    %c0_i32 = arith.constant 0 : i32
    %c0_i32_0 = arith.constant 0 : i32
    %c0_i32_1 = arith.constant 0 : i32
    return %arg0, %c0_i32, %c0_i32_0 : i32, i32, i32
  }
  func.func @transform_1(%arg0: i32) -> (i32, i32, i32) {
    %c0_i32 = arith.constant 0 : i32
    %c0_i32_0 = arith.constant 0 : i32
    %c0_i32_1 = arith.constant 0 : i32
    return %arg0, %c0_i32, %c0_i32_0 : i32, i32, i32
  }
  func.func @transform_2(%arg0: i32) -> (i32, i32) {
    %c0_i32 = arith.constant 0 : i32
    %c0_i32_0 = arith.constant 0 : i32
    %c0_i32_1 = arith.constant 0 : i32
    return %c0_i32, %c0_i32_0 : i32, i32
  }
  func.func @transform_3(%arg0: i32) -> (i32, i32) {
    %c0_i32 = arith.constant 0 : i32
    %c0_i32_0 = arith.constant 0 : i32
    %c0_i32_1 = arith.constant 0 : i32
    return %c0_i32, %c0_i32_0 : i32, i32
  }
  func.func @transform_4(%arg0: i32) -> (i32, i32, i32) {
    %c0_i32 = arith.constant 0 : i32
    %c0_i32_0 = arith.constant 0 : i32
    %c0_i32_1 = arith.constant 0 : i32
    return %arg0, %c0_i32, %c0_i32_0 : i32, i32, i32
  }
}

</mosaic_0001>

<llo_original>
// kernel: tpu_custom_call.1
$region0: #{tpu_custom_call.1}
  #allocation0 [shape = 'u32[]', space=smem, size = 0x4, offset = 0x4, fixed_abs, tag = 'smem constant byte address 0x4 - core index']
  #allocation1 [shape = 'u32[72,128]{1,0:T(1,128)}', space=vmem, size = 0x9000, scoped, tag = 'internal scratch']
  %s0 = inlined_call_operand.hbm [shape: f32[8,16,16], index: 0, kind: input, shape index: {}]
  %s1 = inlined_call_operand.hbm [shape: f32[8,16,16], index: 1, kind: input, shape index: {}]
  %s2 = inlined_call_operand.vmem [shape: bf16[16,256], index: 2, kind: input, shape index: {}]
  %s3 = inlined_call_operand.vmem [shape: bf16[32,16], index: 3, kind: input, shape index: {}]
  %s4 = inlined_call_operand.hbm [shape: f32[2,8,128], index: 4, kind: output, shape index: {}]
  %s5 = sld [smem:[#allocation0]]
  $region57: #{tpu_custom_call.1} parent=0
    _
  %s7 = ssub.s32 1, %s5
  %s8 = scalar_select 0, %s7, %s5
  $region1: #{tpu_custom_call.1} parent=0
    #allocation2 [shape = 'u8[65536]{0}', space=vmem, size = 0x10000, scoped, tag = 'input window, operand 0']
    #allocation3 [shape = 's32[2]{0}', space=sflag, size = 0x8, scoped, tag = 'scoped memory for tpu_custom_call.1']
    #allocation4 [shape = 's32[2]{0}', space=sflag, size = 0x8, scoped, tag = 'scoped memory for tpu_custom_call.1']
    #allocation5 [shape = 'u8[65536]{0}', space=vmem, size = 0x10000, scoped, tag = 'input window, operand 1']
    #allocation6 [shape = 's32[2]{0}', space=sflag, size = 0x8, scoped, tag = 'scoped memory for tpu_custom_call.1']
    #allocation7 [shape = 'u8[8192]{0}', space=vmem, size = 0x2000, scoped, tag = 'output window, operand 0']
    %9 = vsyncpa [#allocation3], 0
    %s10 = scalar_lea.sflag [#allocation3], 1
    %11 = vsyncpa %s10, 0
    %12 = vsyncpa [#allocation6], 0
    %s13 = scalar_lea.sflag [#allocation6], 1
    %14 = vsyncpa %s13, 0
    %15 = vsyncpa [#allocation4], 0
    %s16 = scalar_lea.sflag [#allocation4], 1
    %17 = vsyncpa %s16, 0
    loop: start=0, step=1, limit=4
    $region2: #{tpu_custom_call.1} parent=1 // loop_pre_header
      _
    $region3: #{tpu_custom_call.1} parent=1 // loop_header
      %s19 = sphi 0, %s23
      %p20 = scmp.ge.s32.totalorder %s19, 4
      %s29 = sphi 0, %s31
      %s32 = sphi 0, %s29
      %s33 = sphi 0, %s32
      %s49 = sphi 0, %s33
      %s55 = sphi 0, %s57
      %s58 = sphi 0, %s55
      %s59 = sphi 0, %s58
      %s75 = sphi 0, %s59
      %s79 = sphi 0, %s79
      %s81 = sphi 0, %s79
      %s82 = sphi 0, %s81
      %s96 = sphi 0, %s82
      %s100 = sphi 0, %s100
      %s102 = sphi 0, %s100
      %s103 = sphi 0, %s102
      %s117 = sphi 0, %s103
      %s123 = sphi 0, %s125
      %s126 = sphi 0, %s123
      %s127 = sphi 0, %s126
      %s143 = sphi 0, %s127
    $region4: #{tpu_custom_call.1} parent=1 // loop_header_branch
      %22 = sbr.rel (%p20) target = $region8
    $region5: #{tpu_custom_call.1} parent=1 // loop_body
      %s24 = ssub.s32 %s19, 1
      %s25 = ssub.s32 %s19, 2
      %s26 = sadd.s32 %s19, 1
      %s27 = ssub.s32 %s19, %s26
      %p28 = scmp.eq.s32.totalorder %s27, 0
      %s30 = sadd.s32 %s29, 1
      %s31 = scalar_select %p28, %s29, %s30
      %p34 = pneg %p28
      %p35 = scmp.eq.s32.totalorder %s19, 1
      %p36 = por %p34, %p35
      %p37 = scmp.ne.s32.totalorder %s29, %s32
      %p38 = scmp.eq.s32.totalorder %s19, 0
      %p39 = por %p37, %p38
      %p40 = scmp.ne.s32.totalorder %s29, %s32
      %p41 = scmp.eq.s32.totalorder %s24, 1
      %p42 = por %p40, %p41
      %p43 = scmp.ne.s32.totalorder %s32, %s33
      %p44 = scmp.eq.s32.totalorder %s24, 0
      %p45 = por %p43, %p44
      %p46 = scmp.ne.s32.totalorder %s32, %s33
      %p47 = scmp.eq.s32.totalorder %s25, 1
      %p48 = por %p46, %p47
      %p50 = scmp.ne.s32.totalorder %s33, %s49
      %p51 = scmp.eq.s32.totalorder %s25, 0
      %p52 = por %p50, %p51
      %s53 = ssub.s32 %s19, %s26
      %p54 = scmp.eq.s32.totalorder %s53, 0
      %s56 = sadd.s32 %s55, 1
      %s57 = scalar_select %p54, %s55, %s56
      %p60 = pneg %p54
      %p61 = scmp.eq.s32.totalorder %s19, 1
      %p62 = por %p60, %p61
      %p63 = scmp.ne.s32.totalorder %s55, %s58
      %p64 = scmp.eq.s32.totalorder %s19, 0
      %p65 = por %p63, %p64
      %p66 = scmp.ne.s32.totalorder %s55, %s58
      %p67 = scmp.eq.s32.totalorder %s24, 1
      %p68 = por %p66, %p67
      %p69 = scmp.ne.s32.totalorder %s58, %s59
      %p70 = scmp.eq.s32.totalorder %s24, 0
      %p71 = por %p69, %p70
      %p72 = scmp.ne.s32.totalorder %s58, %s59
      %p73 = scmp.eq.s32.totalorder %s25, 1
      %p74 = por %p72, %p73
      %p76 = scmp.ne.s32.totalorder %s59, %s75
      %p77 = scmp.eq.s32.totalorder %s25, 0
      %p78 = por %p76, %p77
      %s80 = sadd.s32 %s79, 1
      %p83 = scmp.eq.s32.totalorder %s19, 1
      %p84 = scmp.ne.s32.totalorder %s79, %s81
      %p85 = scmp.eq.s32.totalorder %s19, 0
      %p86 = por %p84, %p85
      %p87 = scmp.ne.s32.totalorder %s79, %s81
      %p88 = scmp.eq.s32.totalorder %s24, 1
      %p89 = por %p87, %p88
      %p90 = scmp.ne.s32.totalorder %s81, %s82
      %p91 = scmp.eq.s32.totalorder %s24, 0
      %p92 = por %p90, %p91
      %p93 = scmp.ne.s32.totalorder %s81, %s82
      %p94 = scmp.eq.s32.totalorder %s25, 1
      %p95 = por %p93, %p94
      %p97 = scmp.ne.s32.totalorder %s82, %s96
      %p98 = scmp.eq.s32.totalorder %s25, 0
      %p99 = por %p97, %p98
      %s101 = sadd.s32 %s100, 1
      %p104 = scmp.eq.s32.totalorder %s19, 1
      %p105 = scmp.ne.s32.totalorder %s100, %s102
      %p106 = scmp.eq.s32.totalorder %s19, 0
      %p107 = por %p105, %p106
      %p108 = scmp.ne.s32.totalorder %s100, %s102
      %p109 = scmp.eq.s32.totalorder %s24, 1
      %p110 = por %p108, %p109
      %p111 = scmp.ne.s32.totalorder %s102, %s103
      %p112 = scmp.eq.s32.totalorder %s24, 0
      %p113 = por %p111, %p112
      %p114 = scmp.ne.s32.totalorder %s102, %s103
      %p115 = scmp.eq.s32.totalorder %s25, 1
      %p116 = por %p114, %p115
      %p118 = scmp.ne.s32.totalorder %s103, %s117
      %p119 = scmp.eq.s32.totalorder %s25, 0
      %p120 = por %p118, %p119
      %s121 = ssub.s32 %s19, %s26
      %p122 = scmp.eq.s32.totalorder %s121, 0
      %s124 = sadd.s32 %s123, 1
      %s125 = scalar_select %p122, %s123, %s124
      %p128 = pneg %p122
      %p129 = scmp.eq.s32.totalorder %s19, 1
      %p130 = por %p128, %p129
      %p131 = scmp.ne.s32.totalorder %s123, %s126
      %p132 = scmp.eq.s32.totalorder %s19, 0
      %p133 = por %p131, %p132
      %p134 = scmp.ne.s32.totalorder %s123, %s126
      %p135 = scmp.eq.s32.totalorder %s24, 1
      %p136 = por %p134, %p135
      %p137 = scmp.ne.s32.totalorder %s126, %s127
      %p138 = scmp.eq.s32.totalorder %s24, 0
      %p139 = por %p137, %p138
      %p140 = scmp.ne.s32.totalorder %s126, %s127
      %p141 = scmp.eq.s32.totalorder %s25, 1
      %p142 = por %p140, %p141
      %p144 = scmp.ne.s32.totalorder %s127, %s143
      %p145 = scmp.eq.s32.totalorder %s25, 0
      %p146 = por %p144, %p145
      %p147 = scmp.le.s32.totalorder 1, %s19
      %p148 = scmp.lt.s32.totalorder %s19, 3
      %p149 = pnand %p147, %p148
      %p150 = pneg %p149
      // Predicated region
      $region9: #{tpu_custom_call.1} parent=5 // pred_check
        _
      $region10: #{tpu_custom_call.1} parent=5 // pred_check_branch
        %152 = sbr.rel (%p149) target = $region12
      $region11: #{tpu_custom_call.1} parent=5 // pred_region
        %s153 = ssub.s32 %s19, 1
        // Predicated region
        $region13: #{tpu_custom_call.1} parent=11 // pred_check
          %p154 = pneg %p92
        $region14: #{tpu_custom_call.1} parent=11 // pred_check_branch
          %156 = sbr.rel (%p154) target = $region16
        $region15: #{tpu_custom_call.1} parent=11 // pred_region
          _
        $region16: #{tpu_custom_call.1} parent=11 // pred_fallthru
          _
        // Predicated region
        $region17: #{tpu_custom_call.1} parent=11 // pred_check
          %p157 = pneg %p113
        $region18: #{tpu_custom_call.1} parent=11 // pred_check_branch
          %159 = sbr.rel (%p157) target = $region20
        $region19: #{tpu_custom_call.1} parent=11 // pred_region
          _
        $region20: #{tpu_custom_call.1} parent=11 // pred_fallthru
          _
      $region12: #{tpu_custom_call.1} parent=5 // pred_fallthru
        _
      %p160 = scmp.lt.s32.totalorder %s19, 2
      // Predicated region
      $region21: #{tpu_custom_call.1} parent=5 // pred_check
        %p161 = pneg %p160
      $region22: #{tpu_custom_call.1} parent=5 // pred_check_branch
        %163 = sbr.rel (%p161) target = $region24
      $region23: #{tpu_custom_call.1} parent=5 // pred_region
        // Predicated region
        $region25: #{tpu_custom_call.1} parent=23 // pred_check
          %p164 = pneg %p39
        $region26: #{tpu_custom_call.1} parent=23 // pred_check_branch
          %166 = sbr.rel (%p164) target = $region28
        $region27: #{tpu_custom_call.1} parent=23 // pred_region
          %s167 = sand.u32 %s29, 1
          %s168 = scalar_lea.sflag [#allocation3], %s167
          %s169 = sand.u32 %s29, 1
          %s170 = smul.addr %s169, 64
          %s171 = scalar_lea.vmem [#allocation2], %s170
          %s172 = smul.u32 4, %s19
          %174 = vsyncadd %s168, 0
          %s175 = smul.addr %s172, 2
          %s176 = smul.addr %s175, 8
          %s177 = scalar_lea.hbm %s0, %s176
          %s178 = sshll.u32 %s177, 4
          %s179 = int_to_ptr.hbm [resolvable:$true] %s178
          %s180 = sshll.u32 %s171, 4
          %s181 = int_to_ptr.vmem [resolvable:$true] %s180
          %186 = dma.hbm_to_vmem [thread:$0]  %s179, 1024, %s181, %s168, 128, 128, 8
        $region28: #{tpu_custom_call.1} parent=23 // pred_fallthru
          _
        // Predicated region
        $region29: #{tpu_custom_call.1} parent=23 // pred_check
          %p187 = pneg %p65
        $region30: #{tpu_custom_call.1} parent=23 // pred_check_branch
          %189 = sbr.rel (%p187) target = $region32
        $region31: #{tpu_custom_call.1} parent=23 // pred_region
          %s190 = sand.u32 %s55, 1
          %s191 = scalar_lea.sflag [#allocation6], %s190
          %s192 = sand.u32 %s55, 1
          %s193 = smul.addr %s192, 64
          %s194 = scalar_lea.vmem [#allocation5], %s193
          %s195 = smul.u32 4, %s19
          %197 = vsyncadd %s191, 0
          %s198 = smul.addr %s195, 2
          %s199 = smul.addr %s198, 8
          %s200 = scalar_lea.hbm %s1, %s199
          %s201 = sshll.u32 %s200, 4
          %s202 = int_to_ptr.hbm [resolvable:$true] %s201
          %s203 = sshll.u32 %s194, 4
          %s204 = int_to_ptr.vmem [resolvable:$true] %s203
          %209 = dma.hbm_to_vmem [thread:$0]  %s202, 1024, %s204, %s191, 128, 128, 8
        $region32: #{tpu_custom_call.1} parent=23 // pred_fallthru
          _
      $region24: #{tpu_custom_call.1} parent=5 // pred_fallthru
        _
      %p210 = scmp.le.s32.totalorder 1, %s19
      %p211 = scmp.lt.s32.totalorder %s19, 3
      %p212 = pnand %p210, %p211
      %p213 = pneg %p212
      // Predicated region
      $region33: #{tpu_custom_call.1} parent=5 // pred_check
        _
      $region34: #{tpu_custom_call.1} parent=5 // pred_check_branch
        %215 = sbr.rel (%p212) target = $region36
      $region35: #{tpu_custom_call.1} parent=5 // pred_region
        %s216 = ssub.s32 %s19, 1
        %s217 = sand.u32 %s32, 1
        %s218 = scalar_lea.sflag [#allocation3], %s217
        %s219 = sand.u32 %s32, 1
        %s220 = smul.addr %s219, 64
        %s221 = scalar_lea.vmem [#allocation2], %s220
        // Predicated region
        $region37: #{tpu_custom_call.1} parent=35 // pred_check
          %p222 = pneg %p45
        $region38: #{tpu_custom_call.1} parent=35 // pred_check_branch
          %224 = sbr.rel (%p222) target = $region40
        $region39: #{tpu_custom_call.1} parent=35 // pred_region
          %226 = dma.done %s218, 1024
        $region40: #{tpu_custom_call.1} parent=35 // pred_fallthru
          _
        %s227 = sand.u32 %s58, 1
        %s228 = scalar_lea.sflag [#allocation6], %s227
        %s229 = sand.u32 %s58, 1
        %s230 = smul.addr %s229, 64
        %s231 = scalar_lea.vmem [#allocation5], %s230
        // Predicated region
        $region41: #{tpu_custom_call.1} parent=35 // pred_check
          %p232 = pneg %p71
        $region42: #{tpu_custom_call.1} parent=35 // pred_check_branch
          %234 = sbr.rel (%p232) target = $region44
        $region43: #{tpu_custom_call.1} parent=35 // pred_region
          %236 = dma.done %s228, 1024
        $region44: #{tpu_custom_call.1} parent=35 // pred_fallthru
          _
        %s237 = sand.u32 %s32, 1
        %s238 = scalar_lea.sflag [#allocation3], %s237
        %s239 = sand.u32 %s32, 1
        %s240 = smul.addr %s239, 64
        %s241 = scalar_lea.vmem [#allocation2], %s240
        %p242 = pneg %p45
        %p243 = pneg %p42
        %s244 = sand.u32 %s58, 1
        %s245 = scalar_lea.sflag [#allocation6], %s244
        %s246 = sand.u32 %s58, 1
        %s247 = smul.addr %s246, 64
        %s248 = scalar_lea.vmem [#allocation5], %s247
        %p249 = pneg %p71
        %p250 = pneg %p68
        %p251 = pneg %p92
        %p252 = pneg %p89
        %p253 = pneg %p113
        %p254 = pneg %p110
        %p255 = pneg %p139
        %p256 = pneg %p136
        %s257 = sand.u32 %s126, 1
        %s258 = scalar_lea.sflag [#allocation4], %s257
        %s259 = sand.u32 %s126, 1
        %s260 = smul.addr %s259, 8
        %s261 = scalar_lea.vmem [#allocation7], %s260
        %s262 = smul.u32 4, %s24
        %s263 = smul.u32 4, %s24
        %v265 = vld [vmem:[%s221] sm:$0xff]
        %v266 = vld [vmem:[%s221 + $0x8] sm:$0xff]
        %v267 = vld [vmem:[%s221 + $0x10] sm:$0xff]
        %v268 = vld [vmem:[%s221 + $0x18] sm:$0xff]
        %v269 = vld [vmem:[%s221 + $0x20] sm:$0xff]
        %v270 = vld [vmem:[%s221 + $0x28] sm:$0xff]
        %v271 = vld [vmem:[%s221 + $0x30] sm:$0xff]
        %v272 = vld [vmem:[%s221 + $0x38] sm:$0xff]
        %v273 = vld [vmem:[%s231] sm:$0xff]
        %v274 = vld [vmem:[%s231 + $0x8] sm:$0xff]
        %v275 = vld [vmem:[%s231 + $0x10] sm:$0xff]
        %v276 = vld [vmem:[%s231 + $0x18] sm:$0xff]
        %v277 = vld [vmem:[%s231 + $0x20] sm:$0xff]
        %v278 = vld [vmem:[%s231 + $0x28] sm:$0xff]
        %v279 = vld [vmem:[%s231 + $0x30] sm:$0xff]
        %v280 = vld [vmem:[%s231 + $0x38] sm:$0xff]
        %v281 = vsub.f32 %v265, %v273
        %v282 = vsub.f32 %v266, %v274
        %v283 = vsub.f32 %v267, %v275
        %v284 = vsub.f32 %v268, %v276
        %v285 = vsub.f32 %v269, %v277
        %v286 = vsub.f32 %v270, %v278
        %v287 = vsub.f32 %v271, %v279
        %v288 = vsub.f32 %v272, %v280
        %v289 = vpack.c.bf16 %v282, %v281
        %v290 = vpack.c.bf16 %v284, %v283
        %v291 = vpack.c.bf16 %v286, %v285
        %v292 = vpack.c.bf16 %v288, %v287
        %v293 = vld [vmem:[%s2] sm:$0xff]
        %v294 = vld [vmem:[%s2 + $0x8] sm:$0xff]
        %v297 = vunpack.c.l.b16 %v293
        %v298 = vunpack.c.h.b16 %v293
        %v299 = vunpack.c.l.b16 %v294
        %v300 = vunpack.c.h.b16 %v294
        %v301 = vpack.c.b16 %v299, %v297
        %v302 = vpack.c.b16 %v300, %v298
        %vm305 = vcmask 130048
        %v307 = vsel %vm305, %v289, 0
        %v310 = vsel %vm305, %v290, 0
        %v313 = vsel %vm305, %v291, 0
        %v316 = vsel %vm305, %v292, 0
        %318 = vmatpush.bf16.msra.mxu0 0
        %319 = vmatpush.bf16.msra.mxu0 0
        %320 = vmatpush.bf16.msra.mxu0 0
        %321 = vmatpush.bf16.msra.mxu0 0
        %322 = vmatpush.bf16.msra.mxu0 0
        %323 = vmatpush.bf16.msra.mxu0 0
        %324 = vmatpush.bf16.msra.mxu0 0
        %325 = vmatpush.bf16.msra.mxu0 %v301
        %326 = vmatmul.bf16.gmra.mxu0 %v307
        %v327 = vpop.f32.mrf.mxu0
        %v328 = vadd.f32 0.0, %v327
        %v329 = vpop.f32.mrf.mxu0
        %v330 = vadd.f32 0.0, %v329
        %331 = vmatmul.bf16.gmra.mxu0 %v310
        %v332 = vpop.f32.mrf.mxu0
        %v333 = vadd.f32 0.0, %v332
        %v334 = vpop.f32.mrf.mxu0
        %v335 = vadd.f32 0.0, %v334
        %336 = vmatmul.bf16.gmra.mxu0 %v313
        %v337 = vpop.f32.mrf.mxu0
        %v338 = vadd.f32 0.0, %v337
        %v339 = vpop.f32.mrf.mxu0
        %v340 = vadd.f32 0.0, %v339
        %341 = vmatmul.bf16.gmra.mxu0 %v316
        %v342 = vpop.f32.mrf.mxu0
        %v343 = vadd.f32 0.0, %v342
        %v344 = vpop.f32.mrf.mxu0
        %v345 = vadd.f32 0.0, %v344
        %346 = vdwg.mxu0
        %347 = vmatpush.bf16.msra.mxu0 0
        %348 = vmatpush.bf16.msra.mxu0 0
        %349 = vmatpush.bf16.msra.mxu0 0
        %350 = vmatpush.bf16.msra.mxu0 0
        %351 = vmatpush.bf16.msra.mxu0 0
        %352 = vmatpush.bf16.msra.mxu0 0
        %353 = vmatpush.bf16.msra.mxu0 0
        %354 = vmatpush.bf16.msra.mxu0 %v302
        %355 = vmatmul.bf16.gmra.mxu0 %v307
        %v356 = vpop.f32.mrf.mxu0
        %v357 = vadd.f32 0.0, %v356
        %v358 = vpop.f32.mrf.mxu0
        %v359 = vadd.f32 0.0, %v358
        %360 = vmatmul.bf16.gmra.mxu0 %v310
        %v361 = vpop.f32.mrf.mxu0
        %v362 = vadd.f32 0.0, %v361
        %v363 = vpop.f32.mrf.mxu0
        %v364 = vadd.f32 0.0, %v363
        %365 = vmatmul.bf16.gmra.mxu0 %v313
        %v366 = vpop.f32.mrf.mxu0
        %v367 = vadd.f32 0.0, %v366
        %v368 = vpop.f32.mrf.mxu0
        %v369 = vadd.f32 0.0, %v368
        %370 = vmatmul.bf16.gmra.mxu0 %v316
        %v371 = vpop.f32.mrf.mxu0
        %v372 = vadd.f32 0.0, %v371
        %v373 = vpop.f32.mrf.mxu0
        %v374 = vadd.f32 0.0, %v373
        %375 = vdwg.mxu0
        %v376 = vpack.c.bf16 %v357, %v328
        %v377 = vpack.c.bf16 %v359, %v330
        %v378 = vpack.c.bf16 %v362, %v333
        %v379 = vpack.c.bf16 %v364, %v335
        %v380 = vpack.c.bf16 %v367, %v338
        %v381 = vpack.c.bf16 %v369, %v340
        %v382 = vpack.c.bf16 %v372, %v343
        %v383 = vpack.c.bf16 %v374, %v345
        %v384 = vld [vmem:[%s3] sm:$0xf]
        %v385 = vld [vmem:[%s3 + $0x4] sm:$0xf]
        %v386 = vld [vmem:[%s3 + $0x8] sm:$0xf]
        %v387 = vld [vmem:[%s3 + $0xc] sm:$0xf]
        %v392 = vunpack.c.l.b16 %v384
        %v393 = vunpack.c.l.b16 %v385
        %v394 = vunpack.c.l.b16 %v386
        %v395 = vunpack.c.l.b16 %v387
        %v396 = vpack.c.b16 %v393, %v392
        %v397 = vpack.c.b16 %v395, %v394
        %v400 = vunpack.c.l.b16 %v376
        %v401 = vunpack.c.h.b16 %v376
        %v402 = vunpack.c.l.b16 %v377
        %v403 = vunpack.c.h.b16 %v377
        %v404 = vpack.c.b16 %v402, %v400
        %v405 = vpack.c.b16 %v403, %v401
        %v409 = vsel %vm305, %v396, 0
        %v412 = vsel %vm305, %v397, 0
        %414 = vmatpush.bf16.msra.mxu0 0
        %415 = vmatpush.bf16.msra.mxu0 0
        %416 = vmatpush.bf16.msra.mxu0 0
        %417 = vmatpush.bf16.msra.mxu0 0
        %418 = vmatpush.bf16.msra.mxu0 0
        %419 = vmatpush.bf16.msra.mxu0 0
        %420 = vmatpush.bf16.msra.mxu0 0
        %421 = vmatpush.bf16.msra.mxu0 %v404
        %422 = vmatmul.bf16.gmra.mxu0 %v409
        %v423 = vpop.f32.mrf.mxu0
        %v424 = vadd.f32 0.0, %v423
        %v425 = vpop.f32.mrf.mxu0
        %v426 = vadd.f32 0.0, %v425
        %427 = vmatmul.bf16.gmra.mxu0 %v412
        %v428 = vpop.f32.mrf.mxu0
        %v429 = vadd.f32 0.0, %v428
        %v430 = vpop.f32.mrf.mxu0
        %v431 = vadd.f32 0.0, %v430
        %432 = vdwg.mxu0
        %433 = vmatpush.bf16.msra.mxu0 0
        %434 = vmatpush.bf16.msra.mxu0 0
        %435 = vmatpush.bf16.msra.mxu0 0
        %436 = vmatpush.bf16.msra.mxu0 0
        %437 = vmatpush.bf16.msra.mxu0 0
        %438 = vmatpush.bf16.msra.mxu0 0
        %439 = vmatpush.bf16.msra.mxu0 0
        %440 = vmatpush.bf16.msra.mxu0 %v405
        %441 = vmatmul.bf16.gmra.mxu0 %v409
        %v442 = vpop.f32.mrf.mxu0
        %v443 = vadd.f32 0.0, %v442
        %v444 = vpop.f32.mrf.mxu0
        %v445 = vadd.f32 0.0, %v444
        %446 = vmatmul.bf16.gmra.mxu0 %v412
        %v447 = vpop.f32.mrf.mxu0
        %v448 = vadd.f32 0.0, %v447
        %v449 = vpop.f32.mrf.mxu0
        %v450 = vadd.f32 0.0, %v449
        %451 = vdwg.mxu0
        %v454 = vunpack.c.l.b16 %v378
        %v455 = vunpack.c.h.b16 %v378
        %v456 = vunpack.c.l.b16 %v379
        %v457 = vunpack.c.h.b16 %v379
        %v458 = vpack.c.b16 %v456, %v454
        %v459 = vpack.c.b16 %v457, %v455
        %462 = vmatpush.bf16.msra.mxu0 0
        %463 = vmatpush.bf16.msra.mxu0 0
        %464 = vmatpush.bf16.msra.mxu0 0
        %465 = vmatpush.bf16.msra.mxu0 0
        %466 = vmatpush.bf16.msra.mxu0 0
        %467 = vmatpush.bf16.msra.mxu0 0
        %468 = vmatpush.bf16.msra.mxu0 0
        %469 = vmatpush.bf16.msra.mxu0 %v458
        %470 = vmatmul.bf16.gmra.mxu0 %v409
        %v471 = vpop.f32.mrf.mxu0
        %v472 = vadd.f32 0.0, %v471
        %v473 = vpop.f32.mrf.mxu0
        %v474 = vadd.f32 0.0, %v473
        %475 = vmatmul.bf16.gmra.mxu0 %v412
        %v476 = vpop.f32.mrf.mxu0
        %v477 = vadd.f32 0.0, %v476
        %v478 = vpop.f32.mrf.mxu0
        %v479 = vadd.f32 0.0, %v478
        %480 = vdwg.mxu0
        %481 = vmatpush.bf16.msra.mxu0 0
        %482 = vmatpush.bf16.msra.mxu0 0
        %483 = vmatpush.bf16.msra.mxu0 0
        %484 = vmatpush.bf16.msra.mxu0 0
        %485 = vmatpush.bf16.msra.mxu0 0
        %486 = vmatpush.bf16.msra.mxu0 0
        %487 = vmatpush.bf16.msra.mxu0 0
        %488 = vmatpush.bf16.msra.mxu0 %v459
        %489 = vmatmul.bf16.gmra.mxu0 %v409
        %v490 = vpop.f32.mrf.mxu0
        %v491 = vadd.f32 0.0, %v490
        %v492 = vpop.f32.mrf.mxu0
        %v493 = vadd.f32 0.0, %v492
        %494 = vmatmul.bf16.gmra.mxu0 %v412
        %v495 = vpop.f32.mrf.mxu0
        %v496 = vadd.f32 0.0, %v495
        %v497 = vpop.f32.mrf.mxu0
        %v498 = vadd.f32 0.0, %v497
        %499 = vdwg.mxu0
        %v502 = vunpack.c.l.b16 %v380
        %v503 = vunpack.c.h.b16 %v380
        %v504 = vunpack.c.l.b16 %v381
        %v505 = vunpack.c.h.b16 %v381
        %v506 = vpack.c.b16 %v504, %v502
        %v507 = vpack.c.b16 %v505, %v503
        %510 = vmatpush.bf16.msra.mxu0 0
        %511 = vmatpush.bf16.msra.mxu0 0
        %512 = vmatpush.bf16.msra.mxu0 0
        %513 = vmatpush.bf16.msra.mxu0 0
        %514 = vmatpush.bf16.msra.mxu0 0
        %515 = vmatpush.bf16.msra.mxu0 0
        %516 = vmatpush.bf16.msra.mxu0 0
        %517 = vmatpush.bf16.msra.mxu0 %v506
        %518 = vmatmul.bf16.gmra.mxu0 %v409
        %v519 = vpop.f32.mrf.mxu0
        %v520 = vadd.f32 0.0, %v519
        %v521 = vpop.f32.mrf.mxu0
        %v522 = vadd.f32 0.0, %v521
        %523 = vmatmul.bf16.gmra.mxu0 %v412
        %v524 = vpop.f32.mrf.mxu0
        %v525 = vadd.f32 0.0, %v524
        %v526 = vpop.f32.mrf.mxu0
        %v527 = vadd.f32 0.0, %v526
        %528 = vdwg.mxu0
        %529 = vmatpush.bf16.msra.mxu0 0
        %530 = vmatpush.bf16.msra.mxu0 0
        %531 = vmatpush.bf16.msra.mxu0 0
        %532 = vmatpush.bf16.msra.mxu0 0
        %533 = vmatpush.bf16.msra.mxu0 0
        %534 = vmatpush.bf16.msra.mxu0 0
        %535 = vmatpush.bf16.msra.mxu0 0
        %536 = vmatpush.bf16.msra.mxu0 %v507
        %537 = vmatmul.bf16.gmra.mxu0 %v409
        %v538 = vpop.f32.mrf.mxu0
        %v539 = vadd.f32 0.0, %v538
        %v540 = vpop.f32.mrf.mxu0
        %v541 = vadd.f32 0.0, %v540
        %542 = vmatmul.bf16.gmra.mxu0 %v412
        %v543 = vpop.f32.mrf.mxu0
        %v544 = vadd.f32 0.0, %v543
        %v545 = vpop.f32.mrf.mxu0
        %v546 = vadd.f32 0.0, %v545
        %547 = vdwg.mxu0
        %v550 = vunpack.c.l.b16 %v382
        %v551 = vunpack.c.h.b16 %v382
        %v552 = vunpack.c.l.b16 %v383
        %v553 = vunpack.c.h.b16 %v383
        %v554 = vpack.c.b16 %v552, %v550
        %v555 = vpack.c.b16 %v553, %v551
        %558 = vmatpush.bf16.msra.mxu0 0
        %559 = vmatpush.bf16.msra.mxu0 0
        %560 = vmatpush.bf16.msra.mxu0 0
        %561 = vmatpush.bf16.msra.mxu0 0
        %562 = vmatpush.bf16.msra.mxu0 0
        %563 = vmatpush.bf16.msra.mxu0 0
        %564 = vmatpush.bf16.msra.mxu0 0
        %565 = vmatpush.bf16.msra.mxu0 %v554
        %566 = vmatmul.bf16.gmra.mxu0 %v409
        %v567 = vpop.f32.mrf.mxu0
        %v568 = vadd.f32 0.0, %v567
        %v569 = vpop.f32.mrf.mxu0
        %v570 = vadd.f32 0.0, %v569
        %571 = vmatmul.bf16.gmra.mxu0 %v412
        %v572 = vpop.f32.mrf.mxu0
        %v573 = vadd.f32 0.0, %v572
        %v574 = vpop.f32.mrf.mxu0
        %v575 = vadd.f32 0.0, %v574
        %576 = vdwg.mxu0
        %577 = vmatpush.bf16.msra.mxu0 0
        %578 = vmatpush.bf16.msra.mxu0 0
        %579 = vmatpush.bf16.msra.mxu0 0
        %580 = vmatpush.bf16.msra.mxu0 0
        %581 = vmatpush.bf16.msra.mxu0 0
        %582 = vmatpush.bf16.msra.mxu0 0
        %583 = vmatpush.bf16.msra.mxu0 0
        %584 = vmatpush.bf16.msra.mxu0 %v555
        %585 = vmatmul.bf16.gmra.mxu0 %v409
        %v586 = vpop.f32.mrf.mxu0
        %v587 = vadd.f32 0.0, %v586
        %v588 = vpop.f32.mrf.mxu0
        %v589 = vadd.f32 0.0, %v588
        %590 = vmatmul.bf16.gmra.mxu0 %v412
        %v591 = vpop.f32.mrf.mxu0
        %v592 = vadd.f32 0.0, %v591
        %v593 = vpop.f32.mrf.mxu0
        %v594 = vadd.f32 0.0, %v593
        %595 = vdwg.mxu0
        %v596 = vadd.f32 %v424, %v448
        %v597 = vadd.f32 %v426, %v450
        %v598 = vadd.f32 %v472, %v496
        %v599 = vadd.f32 %v474, %v498
        %v600 = vadd.f32 %v520, %v544
        %v601 = vadd.f32 %v522, %v546
        %v602 = vadd.f32 %v568, %v592
        %v603 = vadd.f32 %v570, %v594
        %v604 = vsub.f32 %v443, %v429
        %v605 = vsub.f32 %v445, %v431
        %v606 = vsub.f32 %v491, %v477
        %v607 = vsub.f32 %v493, %v479
        %v608 = vsub.f32 %v539, %v525
        %v609 = vsub.f32 %v541, %v527
        %v610 = vsub.f32 %v587, %v573
        %v611 = vsub.f32 %v589, %v575
        %v612 = vmul.f32 %v596, %v596
        %v613 = vmul.f32 %v597, %v597
        %v614 = vmul.f32 %v598, %v598
        %v615 = vmul.f32 %v599, %v599
        %v616 = vmul.f32 %v600, %v600
        %v617 = vmul.f32 %v601, %v601
        %v618 = vmul.f32 %v602, %v602
        %v619 = vmul.f32 %v603, %v603
        %v620 = vmul.f32 %v604, %v604
        %v621 = vmul.f32 %v605, %v605
        %v622 = vmul.f32 %v606, %v606
        %v623 = vmul.f32 %v607, %v607
        %v624 = vmul.f32 %v608, %v608
        %v625 = vmul.f32 %v609, %v609
        %v626 = vmul.f32 %v610, %v610
        %v627 = vmul.f32 %v611, %v611
        %v628 = vadd.f32 %v612, %v620
        %v629 = vadd.f32 %v613, %v621
        %v630 = vadd.f32 %v614, %v622
        %v631 = vadd.f32 %v615, %v623
        %v632 = vadd.f32 %v616, %v624
        %v633 = vadd.f32 %v617, %v625
        %v634 = vadd.f32 %v618, %v626
        %v635 = vadd.f32 %v619, %v627
        %v636 = vrsqrt.pop %v628
        %v637 = vmul.f32 %v636, %v628
        %v638 = vmul.f32 %v637, %v636
        %v639 = vmul.f32 0.5, %v638
        %v640 = vsub.f32 1.5, %v639
        %v641 = vmul.f32 %v636, %v640
        %v642 = vmul.f32 %v628, %v641
        %vm643 = vcmp.eq.f32.partialorder %v628, inf
        %v644 = vsel %vm643, %v628, %v642
        %vm645 = vcmp.eq.f32.partialorder %v628, 0.0
        %v646 = vand.u32 %v628, 2147483648
        %v647 = vsel %vm645, %v646, %v644
        %v648 = vrsqrt.pop %v629
        %v649 = vmul.f32 %v648, %v629
        %v650 = vmul.f32 %v649, %v648
        %v651 = vmul.f32 0.5, %v650
        %v652 = vsub.f32 1.5, %v651
        %v653 = vmul.f32 %v648, %v652
        %v654 = vmul.f32 %v629, %v653
        %vm655 = vcmp.eq.f32.partialorder %v629, inf
        %v656 = vsel %vm655, %v629, %v654
        %vm657 = vcmp.eq.f32.partialorder %v629, 0.0
        %v658 = vand.u32 %v629, 2147483648
        %v659 = vsel %vm657, %v658, %v656
        %v660 = vrsqrt.pop %v630
        %v661 = vmul.f32 %v660, %v630
        %v662 = vmul.f32 %v661, %v660
        %v663 = vmul.f32 0.5, %v662
        %v664 = vsub.f32 1.5, %v663
        %v665 = vmul.f32 %v660, %v664
        %v666 = vmul.f32 %v630, %v665
        %vm667 = vcmp.eq.f32.partialorder %v630, inf
        %v668 = vsel %vm667, %v630, %v666
        %vm669 = vcmp.eq.f32.partialorder %v630, 0.0
        %v670 = vand.u32 %v630, 2147483648
        %v671 = vsel %vm669, %v670, %v668
        %v672 = vrsqrt.pop %v631
        %v673 = vmul.f32 %v672, %v631
        %v674 = vmul.f32 %v673, %v672
        %v675 = vmul.f32 0.5, %v674
        %v676 = vsub.f32 1.5, %v675
        %v677 = vmul.f32 %v672, %v676
        %v678 = vmul.f32 %v631, %v677
        %vm679 = vcmp.eq.f32.partialorder %v631, inf
        %v680 = vsel %vm679, %v631, %v678
        %vm681 = vcmp.eq.f32.partialorder %v631, 0.0
        %v682 = vand.u32 %v631, 2147483648
        %v683 = vsel %vm681, %v682, %v680
        %v684 = vrsqrt.pop %v632
        %v685 = vmul.f32 %v684, %v632
        %v686 = vmul.f32 %v685, %v684
        %v687 = vmul.f32 0.5, %v686
        %v688 = vsub.f32 1.5, %v687
        %v689 = vmul.f32 %v684, %v688
        %v690 = vmul.f32 %v632, %v689
        %vm691 = vcmp.eq.f32.partialorder %v632, inf
        %v692 = vsel %vm691, %v632, %v690
        %vm693 = vcmp.eq.f32.partialorder %v632, 0.0
        %v694 = vand.u32 %v632, 2147483648
        %v695 = vsel %vm693, %v694, %v692
        %v696 = vrsqrt.pop %v633
        %v697 = vmul.f32 %v696, %v633
        %v698 = vmul.f32 %v697, %v696
        %v699 = vmul.f32 0.5, %v698
        %v700 = vsub.f32 1.5, %v699
        %v701 = vmul.f32 %v696, %v700
        %v702 = vmul.f32 %v633, %v701
        %vm703 = vcmp.eq.f32.partialorder %v633, inf
        %v704 = vsel %vm703, %v633, %v702
        %vm705 = vcmp.eq.f32.partialorder %v633, 0.0
        %v706 = vand.u32 %v633, 2147483648
        %v707 = vsel %vm705, %v706, %v704
        %v708 = vrsqrt.pop %v634
        %v709 = vmul.f32 %v708, %v634
        %v710 = vmul.f32 %v709, %v708
        %v711 = vmul.f32 0.5, %v710
        %v712 = vsub.f32 1.5, %v711
        %v713 = vmul.f32 %v708, %v712
        %v714 = vmul.f32 %v634, %v713
        %vm715 = vcmp.eq.f32.partialorder %v634, inf
        %v716 = vsel %vm715, %v634, %v714
        %vm717 = vcmp.eq.f32.partialorder %v634, 0.0
        %v718 = vand.u32 %v634, 2147483648
        %v719 = vsel %vm717, %v718, %v716
        %v720 = vrsqrt.pop %v635
        %v721 = vmul.f32 %v720, %v635
        %v722 = vmul.f32 %v721, %v720
        %v723 = vmul.f32 0.5, %v722
        %v724 = vsub.f32 1.5, %v723
        %v725 = vmul.f32 %v720, %v724
        %v726 = vmul.f32 %v635, %v725
        %vm727 = vcmp.eq.f32.partialorder %v635, inf
        %v728 = vsel %vm727, %v635, %v726
        %vm729 = vcmp.eq.f32.partialorder %v635, 0.0
        %v730 = vand.u32 %v635, 2147483648
        %v731 = vsel %vm729, %v730, %v728
        %v732 = vadd.f32 %v647, %v659
        %v733 = vadd.f32 %v732, %v671
        %v734 = vadd.f32 %v733, %v683
        %v735 = vadd.f32 %v734, %v695
        %v736 = vadd.f32 %v735, %v707
        %v737 = vadd.f32 %v736, %v719
        %v738 = vadd.f32 %v737, %v731
        %739 = vst [vmem:[%s261] sm:$0xff] %v738
        %s740 = sand.u32 %s126, 1
        %s741 = scalar_lea.sflag [#allocation4], %s740
        %s742 = sand.u32 %s126, 1
        %s743 = smul.addr %s742, 8
        %s744 = scalar_lea.vmem [#allocation7], %s743
        // Predicated region
        $region45: #{tpu_custom_call.1} parent=35 // pred_check
          %p745 = pneg %p136
        $region46: #{tpu_custom_call.1} parent=35 // pred_check_branch
          %747 = sbr.rel (%p745) target = $region48
        $region47: #{tpu_custom_call.1} parent=35 // pred_region
          %749 = vsyncadd %s741, 0
          %s750 = smul.addr %s24, 8
          %s751 = scalar_lea.hbm %s4, %s750
          %s753 = sshll.u32 %s744, 4
          %s754 = int_to_ptr.vmem [resolvable:$true] %s753
          %s755 = sshll.u32 %s751, 4
          %s756 = int_to_ptr.hbm [resolvable:$true] %s755
          %758 = dma.vmem_to_hbm [thread:$0]  %s754, 128, %s756, %s741
        $region48: #{tpu_custom_call.1} parent=35 // pred_fallthru
          _
      $region36: #{tpu_custom_call.1} parent=5 // pred_fallthru
        _
      %p759 = scmp.le.s32.totalorder 2, %s19
      // Predicated region
      $region49: #{tpu_custom_call.1} parent=5 // pred_check
        %p760 = pneg %p759
      $region50: #{tpu_custom_call.1} parent=5 // pred_check_branch
        %762 = sbr.rel (%p760) target = $region52
      $region51: #{tpu_custom_call.1} parent=5 // pred_region
        %s763 = ssub.s32 %s19, 2
        // Predicated region
        $region53: #{tpu_custom_call.1} parent=51 // pred_check
          %p764 = pneg %p142
        $region54: #{tpu_custom_call.1} parent=51 // pred_check_branch
          %766 = sbr.rel (%p764) target = $region56
        $region55: #{tpu_custom_call.1} parent=51 // pred_region
          %s767 = sand.u32 %s127, 1
          %s768 = scalar_lea.sflag [#allocation4], %s767
          %s769 = sand.u32 %s127, 1
          %s770 = smul.addr %s769, 8
          %s771 = scalar_lea.vmem [#allocation7], %s770
          %773 = dma.done %s768, 128
        $region56: #{tpu_custom_call.1} parent=51 // pred_fallthru
          _
      $region52: #{tpu_custom_call.1} parent=5 // pred_fallthru
        _
    $region6: #{tpu_custom_call.1} parent=1 // loop_footer
      %s23 = sadd.s32 1, %s19
    $region7: #{tpu_custom_call.1} parent=1 // loop_footer_branch
      %18 = sbr.rel target = $region3
    $region8: #{tpu_custom_call.1} parent=1 // loop_exit
      _
    %774 = vsyncpa [#allocation3], 1
    %s775 = scalar_lea.sflag [#allocation3], 1
    %776 = vsyncpa %s775, 1
    %777 = vsyncpa [#allocation6], 1
    %s778 = scalar_lea.sflag [#allocation6], 1
    %779 = vsyncpa %s778, 1
    %780 = vsyncpa [#allocation4], 1
    %s781 = scalar_lea.sflag [#allocation4], 1
    %782 = vsyncpa %s781, 1

</llo_original>
